<compile_context>
chip_gen: v5e
topology: v5e:2x2
jax: 0.10.0
libtpu: 0.0.40
codegen_flags: <defaults>
</compile_context>

<pallas_src>
import functools

import jax
import jax.numpy as jnp
from jax import lax
from jax.experimental import pallas as pl
from jax.experimental.pallas import tpu as pltpu

EPS = 1e-6
NUM_GROUPS = 32
VMEM_LIMIT_BYTES = 48 * 1024 * 1024   # raise above the 16 MiB (v5e) / 32 MiB (v6e) defaults


# ----------------------------- kernels ---------------------------------------

def _gn_stats_kernel(x_ref, gamma_ref, beta_ref, gmat_ref,
                     scale_ref, bias_ref, acc_ref, mean_ref, *, inv_n):
    """Two-pass GroupNorm statistics.

    grid = (N, 2, H // tile_h):
      pass p==0 accumulates per-channel sums -> per-channel (group-broadcast) mean
      pass p==1 accumulates per-channel sum((x-mean)^2) -> inv_std -> (scale, bias)
    Group reduction / broadcast is a tiny matmul against a constant (C, C)
    group-membership matrix (no lane<->sublane reshapes in the kernel).
    """
    p = pl.program_id(1)
    t = pl.program_id(2)
    last_t = pl.num_programs(2) - 1
    C = x_ref.shape[-1]
    x = x_ref[0].astype(jnp.float32).reshape(-1, C)          # (tile_h*W, C)

    @pl.when(t == 0)
    def _():
        acc_ref[...] = jnp.zeros_like(acc_ref)

    @pl.when(p == 0)
    def _():
        acc_ref[...] = acc_ref[...] + jnp.sum(x, axis=0, keepdims=True)

    @pl.when(p == 1)
    def _():
        d = x - mean_ref[...]
        acc_ref[...] = acc_ref[...] + jnp.sum(d * d, axis=0, keepdims=True)

    @pl.when(jnp.logical_and(p == 0, t == last_t))
    def _():
        # per-channel broadcast of the per-group mean
        mean_ref[...] = jnp.dot(acc_ref[...], gmat_ref[...],
                                preferred_element_type=jnp.float32) * inv_n

    @pl.when(jnp.logical_and(p == 1, t == last_t))
    def _():
        var = jnp.dot(acc_ref[...], gmat_ref[...],
                      preferred_element_type=jnp.float32) * inv_n
        inv = lax.rsqrt(var + EPS)
        scale = gamma_ref[...] * inv
        scale_ref[0] = scale.astype(scale_ref.dtype)
        bias_ref[0] = (beta_ref[...] - scale * mean_ref[...]).astype(bias_ref.dtype)


def _conv3x3_impl(x_ref, top_ref, bot_ref, scale_ref, bias_ref, w_ref, cb_ref,
                  res_ref, o_ref, pbuf, approx_recip):
    """Fused (GN-affine + SiLU) -> 3x3 conv (stride 1, pad 1) [-> + residual].

    The input row-tile plus its two halo rows are normalized/activated and written
    into a flat VMEM buffer pbuf of (tile_h+2)*W rows.  Output pixel o = y*W + x
    needs pbuf[o + s] with s = dy*W + dx - 1; the 9 taps are built with sublane
    rolls, masked at the left/right image edge, lane-concatenated into a
    (tile_h*W, 9*Cin) im2col matrix and contracted in ONE MXU matmul.
    """
    _, TH, W, Cin = x_ref.shape
    Cout = o_ref.shape[-1]
    npix = TH * W
    npad = (TH + 2) * W
    cdt = w_ref.dtype                                   # MXU operand dtype (bf16/f32)
    t = pl.program_id(1)
    nt = pl.num_programs(1)

    sc = scale_ref[0]                                   # (1, Cin) f32
    bi = bias_ref[0]                                    # (1, Cin) f32

    def norm_silu(v):                                   # (R, Cin) -> f32
        y = v.astype(jnp.float32) * sc + bi
        sig = pl.reciprocal(1.0 + jnp.exp(-y), approx=approx_recip)   # exp + rcp on EUP
        return y * sig

    # pbuf rows: [0, W)            -> image row (t*TH - 1)   (zeros at the top edge)
    #            [W, (TH+1)*W)     -> the TH interior rows
    #            [(TH+1)*W, npad)  -> image row ((t+1)*TH)    (zeros at the bottom edge)
    pbuf[pl.ds(W, npix), :] = norm_silu(x_ref[0].reshape(npix, Cin))
    pbuf[pl.ds(0, W), :] = norm_silu(top_ref[0, 0])
    pbuf[pl.ds((TH + 1) * W, W), :] = norm_silu(bot_ref[0, 0])

    @pl.when(t == 0)                                    # top edge of the image
    def _():
        pbuf[pl.ds(0, W), :] = jnp.zeros((W, Cin), jnp.float32)

    @pl.when(t == nt - 1)                               # bottom edge of the image
    def _():
        pbuf[pl.ds((TH + 1) * W, W), :] = jnp.zeros((W, Cin), jnp.float32)

    pflat = pbuf[...]                                   # (npad, Cin) f32

    # left/right W-boundary masks (the W-direction zero padding)
    col = lax.broadcasted_iota(jnp.int32, (npix, 1), 0) % W
    not_left = col != 0
    not_right = col != (W - 1)

    pieces = []
    for dy in range(3):
        for dx in range(3):
            s = dy * W + dx - 1                         # static shift
            tap = pflat if s == 0 else pltpu.roll(pflat, (-s) % npad, axis=0)
            tap = tap[:npix, :]
            if dx == 0:
                tap = jnp.where(not_left, tap, 0.0)
            elif dx == 2:
                tap = jnp.where(not_right, tap, 0.0)
            pieces.append(tap.astype(cdt))
    patches = jnp.concatenate(pieces, axis=-1)          # (npix, 9*Cin)

    acc = jnp.dot(patches, w_ref[...], preferred_element_type=jnp.float32)
    acc = acc + cb_ref[...]                             # conv bias (1, Cout) f32
    if res_ref is not None:
        acc = acc + res_ref[0].astype(jnp.float32).reshape(npix, Cout)
    o_ref[0] = acc.reshape(TH, W, Cout).astype(o_ref.dtype)


def _conv3x3_kernel(x_ref, top_ref, bot_ref, scale_ref, bias_ref, w_ref, cb_ref,
                    o_ref, pbuf, *, approx_recip):
    _conv3x3_impl(x_ref, top_ref, bot_ref, scale_ref, bias_ref, w_ref, cb_ref,
                  None, o_ref, pbuf, approx_recip)


def _conv3x3_res_kernel(x_ref, top_ref, bot_ref, scale_ref, bias_ref, w_ref, cb_ref,
                        res_ref, o_ref, pbuf, *, approx_recip):
    _conv3x3_impl(x_ref, top_ref, bot_ref, scale_ref, bias_ref, w_ref, cb_ref,
                  res_ref, o_ref, pbuf, approx_recip)


def _conv1x1_kernel(x_ref, w_ref, b_ref, o_ref, *, compute_dtype):
    """1x1 conv (nin_shortcut) = per-pixel matmul, bf16/f32 operands, f32 accumulate."""
    _, TH, W, Cin = x_ref.shape
    Cout = o_ref.shape[-1]
    xm = x_ref[0].reshape(TH * W, Cin).astype(compute_dtype)
    y = jnp.dot(xm, w_ref[...], preferred_element_type=jnp.float32)
    y = y + b_ref[...]
    o_ref[0] = y.reshape(TH, W, Cout).astype(o_ref.dtype)


# ----------------------------- wrappers ---------------------------------------

def _pick_tile_h(H, cap=32):
    for th in range(min(H, cap), 0, -1):
        if H % th == 0:
            return th
    return H


def gn_scale_bias(x, gamma, beta, *, groups=NUM_GROUPS, tile_h):
    """Per-image, per-channel GroupNorm affine: scale = gamma*inv_std, bias = beta - scale*mean."""
    N, H, W, C = x.shape
    assert C % groups == 0 and H % tile_h == 0
    cg = C // groups
    n_th = H // tile_h
    gidx = jnp.arange(C, dtype=jnp.int32) // cg
    gmat = (gidx[:, None] == gidx[None, :]).astype(jnp.float32)       # (C, C)
    inv_n = 1.0 / float(H * W * cg)

    scale, bias = pl.pallas_call(
        functools.partial(_gn_stats_kernel, inv_n=inv_n),
        out_shape=(jax.ShapeDtypeStruct((N, 1, C), jnp.float32),
                   jax.ShapeDtypeStruct((N, 1, C), jnp.float32)),
        grid=(N, 2, n_th),
        in_specs=[
            pl.BlockSpec((1, tile_h, W, C), lambda n, p, t: (n, t, 0, 0)),
            pl.BlockSpec((1, C), lambda n, p, t: (0, 0)),
            pl.BlockSpec((1, C), lambda n, p, t: (0, 0)),
            pl.BlockSpec((C, C), lambda n, p, t: (0, 0)),
        ],
        out_specs=(pl.BlockSpec((1, 1, C), lambda n, p, t: (n, 0, 0)),
                   pl.BlockSpec((1, 1, C), lambda n, p, t: (n, 0, 0))),
        scratch_shapes=[pltpu.VMEM((1, C), jnp.float32),
                        pltpu.VMEM((1, C), jnp.float32)],
        compiler_params=pltpu.CompilerParams(
            dimension_semantics=("parallel", "arbitrary", "arbitrary"),
            vmem_limit_bytes=VMEM_LIMIT_BYTES),
    )(x, gamma.reshape(1, C), beta.reshape(1, C), gmat)
    return scale, bias


def fused_gn_silu_conv3x3(x, scale, bias, w, b, *, residual=None, tile_h,
                          compute_dtype, out_dtype, approx_recip=None):
    """x: (N,H,W,Cin) NHWC; w: (3,3,Cin,Cout) HWIO; b: (Cout,).  Applies
    (x*scale + bias) -> SiLU -> 3x3 conv [-> + residual] with row tiling + halo."""
    N, H, W, Cin = x.shape
    Cout = w.shape[-1]
    assert H % tile_h == 0
    n_th = H // tile_h
    if approx_recip is None:
        approx_recip = (compute_dtype == jnp.bfloat16)

    w_flat = w.reshape(9 * Cin, Cout).astype(compute_dtype)
    cb = b.reshape(1, Cout).astype(jnp.float32)

    x_spec = pl.BlockSpec((1, tile_h, W, Cin), lambda n, t: (n, t, 0, 0))
    top_spec = pl.BlockSpec((1, 1, W, Cin),
                            lambda n, t: (n, jnp.maximum(t * tile_h - 1, 0), 0, 0))
    bot_spec = pl.BlockSpec((1, 1, W, Cin),
                            lambda n, t: (n, jnp.minimum((t + 1) * tile_h, H - 1), 0, 0))
    sb_spec = pl.BlockSpec((1, 1, Cin), lambda n, t: (n, 0, 0))
    w_spec = pl.BlockSpec((9 * Cin, Cout), lambda n, t: (0, 0))
    cb_spec = pl.BlockSpec((1, Cout), lambda n, t: (0, 0))

    in_specs = [x_spec, top_spec, bot_spec, sb_spec, sb_spec, w_spec, cb_spec]
    args = [x, x, x, scale, bias, w_flat, cb]
    if residual is not None:
        in_specs.append(pl.BlockSpec((1, tile_h, W, Cout), lambda n, t: (n, t, 0, 0)))
        args.append(residual)
        kern = functools.partial(_conv3x3_res_kernel, approx_recip=approx_recip)
    else:
        kern = functools.partial(_conv3x3_kernel, approx_recip=approx_recip)

    return pl.pallas_call(
        kern,
        out_shape=jax.ShapeDtypeStruct((N, H, W, Cout), out_dtype),
        grid=(N, n_th),
        in_specs=in_specs,
        out_specs=pl.BlockSpec((1, tile_h, W, Cout), lambda n, t: (n, t, 0, 0)),
        scratch_shapes=[pltpu.VMEM(((tile_h + 2) * W, Cin), jnp.float32)],
        compiler_params=pltpu.CompilerParams(
            dimension_semantics=("parallel", "parallel"),
            vmem_limit_bytes=VMEM_LIMIT_BYTES),
    )(*args)


def conv1x1(x, w, b, *, tile_h, compute_dtype, out_dtype):
    """x: (N,H,W,Cin); w: (1,1,Cin,Cout); b: (Cout,)."""
    N, H, W, Cin = x.shape
    Cout = w.shape[-1]
    assert H % tile_h == 0
    n_th = H // tile_h
    wf = w.reshape(Cin, Cout).astype(compute_dtype)
    cb = b.reshape(1, Cout).astype(jnp.float32)
    return pl.pallas_call(
        functools.partial(_conv1x1_kernel, compute_dtype=compute_dtype),
        out_shape=jax.ShapeDtypeStruct((N, H, W, Cout), out_dtype),
        grid=(N, n_th),
        in_specs=[pl.BlockSpec((1, tile_h, W, Cin), lambda n, t: (n, t, 0, 0)),
                  pl.BlockSpec((Cin, Cout), lambda n, t: (0, 0)),
                  pl.BlockSpec((1, Cout), lambda n, t: (0, 0))],
        out_specs=pl.BlockSpec((1, tile_h, W, Cout), lambda n, t: (n, t, 0, 0)),
        compiler_params=pltpu.CompilerParams(
            dimension_semantics=("parallel", "parallel"),
            vmem_limit_bytes=VMEM_LIMIT_BYTES),
    )(x, wf, cb)


def resnet_block_forward_nhwc(x, params, in_channels, out_channels, *,
                              groups=NUM_GROUPS, tile_h=None,
                              compute_dtype=jnp.bfloat16):
    """Matches ResnetBlock.forward; NHWC in / NHWC out (channels on the lane axis)."""
    N, H, W, Cin = x.shape
    assert Cin == in_channels
    if tile_h is None:
        tile_h = _pick_tile_h(H)

    s1, b1 = gn_scale_bias(x, params["g1"], params["b1"], groups=groups, tile_h=tile_h)
    h = fused_gn_silu_conv3x3(x, s1, b1, params["w1"], params["c1b"],
                              tile_h=tile_h, compute_dtype=compute_dtype,
                              out_dtype=compute_dtype)                     # norm1+swish+conv1
    s2, b2 = gn_scale_bias(h, params["g2"], params["b2"], groups=groups, tile_h=tile_h)
    if in_channels != out_channels:
        shortcut = conv1x1(x, params["ws"], params["bs"], tile_h=tile_h,
                           compute_dtype=compute_dtype, out_dtype=compute_dtype)
    else:
        shortcut = x
    out = fused_gn_silu_conv3x3(h, s2, b2, params["w2"], params["c2b"],
                                residual=shortcut, tile_h=tile_h,
                                compute_dtype=compute_dtype,
                                out_dtype=x.dtype)                         # norm2+swish+conv2+add
    return out


def resnet_block_forward(x_nchw, params, in_channels, out_channels, **kw):
    """PyTorch-layout (NCHW) convenience wrapper.  Prefer the NHWC entry point:
    these transposes are a full HBM round trip each and are avoidable if the
    surrounding model stays NHWC."""
    x = jnp.transpose(x_nchw, (0, 2, 3, 1))
    y = resnet_block_forward_nhwc(x, params, in_channels, out_channels, **kw)
    return jnp.transpose(y, (0, 3, 1, 2))


# ----------------------------- pure-JAX reference ------------------------------

def _ref_forward_nhwc(x, params, in_channels, out_channels, groups=NUM_GROUPS):
    def gn(v, gamma, beta):
        N, H, W, C = v.shape
        vg = v.reshape(N, H, W, groups, C // groups)
        mean = vg.mean(axis=(1, 2, 4), keepdims=True)
        var = vg.var(axis=(1, 2, 4), keepdims=True)
        vn = ((vg - mean) * lax.rsqrt(var + EPS)).reshape(N, H, W, C)
        return vn * gamma + beta

    def conv(v, w_hwio, b, k):
        y = lax.conv_general_dilated(v, w_hwio, (1, 1), [(k // 2, k // 2)] * 2,
                                     dimension_numbers=("NHWC", "HWIO", "NHWC"))
        return y + b

    h = conv(jax.nn.silu(gn(x, params["g1"], params["b1"])), params["w1"], params["c1b"], 3)
    h = jax.nn.silu(gn(h, params["g2"], params["b2"]))
    h = conv(h, params["w2"], params["c2b"], 3)
    sc = conv(x, params["ws"], params["bs"], 1) if in_channels != out_channels else x
    return sc + h


# ----------------------------- main --------------------------------------------

if __name__ == "__main__":
    # GroupNorm(num_groups=32) requires channels % 32 == 0.
    N, Cin, Cout, H, W = 2, 32, 64, 16, 16
    TILE_H = 8   # 2 row-tiles per image -> exercises the halo / tiling path

    key = jax.random.PRNGKey(0)
    ks = jax.random.split(key, 11)
    params = {
        "g1": 1.0 + 0.1 * jax.random.normal(ks[0], (Cin,), jnp.float32),
        "b1": 0.1 * jax.random.normal(ks[1], (Cin,), jnp.float32),
        "w1": jax.random.normal(ks[2], (3, 3, Cin, Cout), jnp.float32) / jnp.sqrt(9.0 * Cin),
        "c1b": 0.1 * jax.random.normal(ks[3], (Cout,), jnp.float32),
        "g2": 1.0 + 0.1 * jax.random.normal(ks[4], (Cout,), jnp.float32),
        "b2": 0.1 * jax.random.normal(ks[5], (Cout,), jnp.float32),
        "w2": jax.random.normal(ks[6], (3, 3, Cout, Cout), jnp.float32) / jnp.sqrt(9.0 * Cout),
        "c2b": 0.1 * jax.random.normal(ks[7], (Cout,), jnp.float32),
        "ws": jax.random.normal(ks[8], (1, 1, Cin, Cout), jnp.float32) / jnp.sqrt(1.0 * Cin),
        "bs": 0.1 * jax.random.normal(ks[9], (Cout,), jnp.float32),
    }
    x = jax.random.normal(ks[10], (N, H, W, Cin), jnp.float32)   # NHWC

    ref = _ref_forward_nhwc(x, params, Cin, Cout)

    # bf16 MXU fast path (default)
    out = resnet_block_forward_nhwc(x, params, Cin, Cout, tile_h=TILE_H,
                                    compute_dtype=jnp.bfloat16)
    out = jax.block_until_ready(out)
    assert out.shape == (N, H, W, Cout), out.shape
    err_bf16 = float(jnp.max(jnp.abs(out.astype(jnp.float32) - ref)))
    assert jnp.allclose(out.astype(jnp.float32), ref, atol=1e-1, rtol=1e-1), err_bf16

    # f32 path for a tight numerical check of the kernel structure
    out32 = resnet_block_forward_nhwc(x, params, Cin, Cout, tile_h=TILE_H,
                                      compute_dtype=jnp.float32)
    out32 = jax.block_until_ready(out32)
    err_f32 = float(jnp.max(jnp.abs(out32 - ref)))
    assert jnp.allclose(out32, ref, atol=2e-3, rtol=2e-3), err_f32

    print("KERNEL_OK")
</pallas_src>

<mosaic_0001>
module attributes {stable_mosaic.version = 11 : i64} {
  func.func @_gn_stats_kernel(%arg0: i32, %arg1: i32, %arg2: i32, %arg3: memref<1x8x16x32xf32, #tpu.memory_space<vmem>>, %arg4: memref<1x32xf32, #tpu.memory_space<vmem>>, %arg5: memref<1x32xf32, #tpu.memory_space<vmem>>, %arg6: memref<32x32xf32, #tpu.memory_space<vmem>>, %arg7: memref<1x1x32xf32, #tpu.memory_space<vmem>>, %arg8: memref<1x1x32xf32, #tpu.memory_space<vmem>>, %arg9: memref<1x32xf32, #tpu.memory_space<vmem>>, %arg10: memref<1x32xf32, #tpu.memory_space<vmem>>) attributes {dimension_semantics = [#tpu.dimension_semantics<parallel>, #tpu.dimension_semantics<arbitrary>, #tpu.dimension_semantics<arbitrary>], iteration_bounds = array<i64: 2, 2, 2>, scalar_prefetch = 0 : i64, scratch_operands = 2 : i64, tpu.core_type = #tpu.core_type<tc>, window_params = [{transform_indices = @transform_0, window_bounds = array<i64: 1, 8, 16, 32>}, {pipeline_mode = #tpu.pipeline_mode<synchronous>, transform_indices = @transform_1, window_bounds = array<i64: 1, 32>}, {pipeline_mode = #tpu.pipeline_mode<synchronous>, transform_indices = @transform_2, window_bounds = array<i64: 1, 32>}, {pipeline_mode = #tpu.pipeline_mode<synchronous>, transform_indices = @transform_3, window_bounds = array<i64: 32, 32>}, {transform_indices = @transform_4, window_bounds = array<i64: 1, 1, 32>}, {transform_indices = @transform_5, window_bounds = array<i64: 1, 1, 32>}]} {
    %c0 = arith.constant 0 : index
    %c0_0 = arith.constant 0 : index
    %c0_1 = arith.constant 0 : index
    %c0_2 = arith.constant 0 : index
    %0 = vector.load %arg3[%c0, %c0_0, %c0_1, %c0_2] : memref<1x8x16x32xf32, #tpu.memory_space<vmem>>, vector<1x8x16x32xf32>
    %1 = vector.shape_cast %0 : vector<1x8x16x32xf32> to vector<8x16x32xf32>
    %2 = vector.shape_cast %1 : vector<8x16x32xf32> to vector<128x32xf32>
    %c0_i32 = arith.constant 0 : i32
    %3 = arith.cmpi eq, %arg2, %c0_i32 : i32
    %4 = arith.extui %3 : i1 to i32
    %c0_i32_3 = arith.constant 0 : i32
    %5 = arith.cmpi ne, %4, %c0_i32_3 : i32
    scf.if %5 {
      %cst = arith.constant 0.000000e+00 : f32
      %22 = vector.broadcast %cst : f32 to vector<1x32xf32>
      %c0_13 = arith.constant 0 : index
      %c0_14 = arith.constant 0 : index
      %23 = vector.load %arg9[%c0_13, %c0_14] : memref<1x32xf32, #tpu.memory_space<vmem>>, vector<1x32xf32>
      tpu.vector_store %arg9[%c0_13, %c0_14], %22 {strides = array<i32>} : memref<1x32xf32, #tpu.memory_space<vmem>>, vector<1x32xf32>,
    } else {
    }
    %c0_i32_4 = arith.constant 0 : i32
    %6 = arith.cmpi eq, %arg1, %c0_i32_4 : i32
    %7 = arith.extui %6 : i1 to i32
    %c0_i32_5 = arith.constant 0 : i32
    %8 = arith.cmpi ne, %7, %c0_i32_5 : i32
    scf.if %8 {
      %c0_13 = arith.constant 0 : index
      %c0_14 = arith.constant 0 : index
      %22 = vector.load %arg9[%c0_13, %c0_14] : memref<1x32xf32, #tpu.memory_space<vmem>>, vector<1x32xf32>
      %cst = arith.constant dense<0.000000e+00> : vector<32xf32>
      %23 = vector.multi_reduction <add>, %2, %cst [0] : vector<128x32xf32> to vector<32xf32>
      %24 = vector.shape_cast %23 : vector<32xf32> to vector<1x32xf32>
      %25 = arith.addf %22, %24 : vector<1x32xf32>
      %c0_15 = arith.constant 0 : index
      %c0_16 = arith.constant 0 : index
      %26 = vector.load %arg9[%c0_15, %c0_16] : memref<1x32xf32, #tpu.memory_space<vmem>>, vector<1x32xf32>
      tpu.vector_store %arg9[%c0_15, %c0_16], %25 {strides = array<i32>} : memref<1x32xf32, #tpu.memory_space<vmem>>, vector<1x32xf32>,
    } else {
    }
    %c1_i32 = arith.constant 1 : i32
    %9 = arith.cmpi eq, %arg1, %c1_i32 : i32
    %10 = arith.extui %9 : i1 to i32
    %c0_i32_6 = arith.constant 0 : i32
    %11 = arith.cmpi ne, %10, %c0_i32_6 : i32
    scf.if %11 {
      %c0_13 = arith.constant 0 : index
      %c0_14 = arith.constant 0 : index
      %22 = vector.load %arg10[%c0_13, %c0_14] : memref<1x32xf32, #tpu.memory_space<vmem>>, vector<1x32xf32>
      %23 = vector.broadcast %22 : vector<1x32xf32> to vector<128x32xf32>
      %24 = arith.subf %2, %23 : vector<128x32xf32>
      %c0_15 = arith.constant 0 : index
      %c0_16 = arith.constant 0 : index
      %25 = vector.load %arg9[%c0_15, %c0_16] : memref<1x32xf32, #tpu.memory_space<vmem>>, vector<1x32xf32>
      %26 = arith.mulf %24, %24 : vector<128x32xf32>
      %cst = arith.constant dense<0.000000e+00> : vector<32xf32>
      %27 = vector.multi_reduction <add>, %26, %cst [0] : vector<128x32xf32> to vector<32xf32>
      %28 = vector.shape_cast %27 : vector<32xf32> to vector<1x32xf32>
      %29 = arith.addf %25, %28 : vector<1x32xf32>
      %c0_17 = arith.constant 0 : index
      %c0_18 = arith.constant 0 : index
      %30 = vector.load %arg9[%c0_17, %c0_18] : memref<1x32xf32, #tpu.memory_space<vmem>>, vector<1x32xf32>
      tpu.vector_store %arg9[%c0_17, %c0_18], %29 {strides = array<i32>} : memref<1x32xf32, #tpu.memory_space<vmem>>, vector<1x32xf32>,
    } else {
    }
    %c0_i32_7 = arith.constant 0 : i32
    %12 = arith.cmpi eq, %arg1, %c0_i32_7 : i32
    %c1_i32_8 = arith.constant 1 : i32
    %13 = arith.cmpi eq, %arg2, %c1_i32_8 : i32
    %14 = arith.andi %12, %13 : i1
    %15 = arith.extui %14 : i1 to i32
    %c0_i32_9 = arith.constant 0 : i32
    %16 = arith.cmpi ne, %15, %c0_i32_9 : i32
    scf.if %16 {
      %c0_13 = arith.constant 0 : index
      %c0_14 = arith.constant 0 : index
      %22 = vector.load %arg9[%c0_13, %c0_14] : memref<1x32xf32, #tpu.memory_space<vmem>>, vector<1x32xf32>
      %c0_15 = arith.constant 0 : index
      %c0_16 = arith.constant 0 : index
      %23 = vector.load %arg6[%c0_15, %c0_16] : memref<32x32xf32, #tpu.memory_space<vmem>>, vector<32x32xf32>
      %cst = arith.constant dense<0.000000e+00> : vector<1x32xf32>
      %24 = tpu.matmul %22, %23, %cst {dimension_numbers = #tpu.dot_dimension_numbers<[1], [0], [0], [1], [0, 0, 1, 1], [], []>} : vector<1x32xf32>, vector<32x32xf32>, vector<1x32xf32> -> vector<1x32xf32>
      %cst_17 = arith.constant 3.906250e-03 : f32
      %25 = vector.broadcast %cst_17 : f32 to vector<1x32xf32>
      %26 = arith.mulf %24, %25 : vector<1x32xf32>
      %c0_18 = arith.constant 0 : index
      %c0_19 = arith.constant 0 : index
      %27 = vector.load %arg10[%c0_18, %c0_19] : memref<1x32xf32, #tpu.memory_space<vmem>>, vector<1x32xf32>
      tpu.vector_store %arg10[%c0_18, %c0_19], %26 {strides = array<i32>} : memref<1x32xf32, #tpu.memory_space<vmem>>, vector<1x32xf32>,
    } else {
    }
    %c1_i32_10 = arith.constant 1 : i32
    %17 = arith.cmpi eq, %arg1, %c1_i32_10 : i32
    %c1_i32_11 = arith.constant 1 : i32
    %18 = arith.cmpi eq, %arg2, %c1_i32_11 : i32
    %19 = arith.andi %17, %18 : i1
    %20 = arith.extui %19 : i1 to i32
    %c0_i32_12 = arith.constant 0 : i32
    %21 = arith.cmpi ne, %20, %c0_i32_12 : i32
    scf.if %21 {
      %c0_13 = arith.constant 0 : index
      %c0_14 = arith.constant 0 : index
      %22 = vector.load %arg9[%c0_13, %c0_14] : memref<1x32xf32, #tpu.memory_space<vmem>>, vector<1x32xf32>
      %c0_15 = arith.constant 0 : index
      %c0_16 = arith.constant 0 : index
      %23 = vector.load %arg6[%c0_15, %c0_16] : memref<32x32xf32, #tpu.memory_space<vmem>>, vector<32x32xf32>
      %cst = arith.constant dense<0.000000e+00> : vector<1x32xf32>
      %24 = tpu.matmul %22, %23, %cst {dimension_numbers = #tpu.dot_dimension_numbers<[1], [0], [0], [1], [0, 0, 1, 1], [], []>} : vector<1x32xf32>, vector<32x32xf32>, vector<1x32xf32> -> vector<1x32xf32>
      %cst_17 = arith.constant 3.906250e-03 : f32
      %25 = vector.broadcast %cst_17 : f32 to vector<1x32xf32>
      %26 = arith.mulf %24, %25 : vector<1x32xf32>
      %cst_18 = arith.constant 9.99999997E-7 : f32
      %27 = vector.broadcast %cst_18 : f32 to vector<1x32xf32>
      %28 = arith.addf %26, %27 : vector<1x32xf32>
      %29 = math.rsqrt %28 : vector<1x32xf32>
      %c0_19 = arith.constant 0 : index
      %c0_20 = arith.constant 0 : index
      %30 = vector.load %arg4[%c0_19, %c0_20] : memref<1x32xf32, #tpu.memory_space<vmem>>, vector<1x32xf32>
      %31 = arith.mulf %30, %29 : vector<1x32xf32>
      %c0_21 = arith.constant 0 : index
      %c0_22 = arith.constant 0 : index
      %c0_23 = arith.constant 0 : index
      %32 = vector.load %arg7[%c0_21, %c0_22, %c0_23] : memref<1x1x32xf32, #tpu.memory_space<vmem>>, vector<1x1x32xf32>
      %33 = vector.shape_cast %32 : vector<1x1x32xf32> to vector<1x32xf32>
      %34 = vector.shape_cast %31 : vector<1x32xf32> to vector<1x1x32xf32>
      tpu.vector_store %arg7[%c0_21, %c0_22, %c0_23], %34 {strides = array<i32>} : memref<1x1x32xf32, #tpu.memory_space<vmem>>, vector<1x1x32xf32>,
      %c0_24 = arith.constant 0 : index
      %c0_25 = arith.constant 0 : index
      %35 = vector.load %arg5[%c0_24, %c0_25] : memref<1x32xf32, #tpu.memory_space<vmem>>, vector<1x32xf32>
      %c0_26 = arith.constant 0 : index
      %c0_27 = arith.constant 0 : index
      %36 = vector.load %arg10[%c0_26, %c0_27] : memref<1x32xf32, #tpu.memory_space<vmem>>, vector<1x32xf32>
      %37 = arith.mulf %31, %36 : vector<1x32xf32>
      %38 = arith.subf %35, %37 : vector<1x32xf32>
      %c0_28 = arith.constant 0 : index
      %c0_29 = arith.constant 0 : index
      %c0_30 = arith.constant 0 : index
      %39 = vector.load %arg8[%c0_28, %c0_29, %c0_30] : memref<1x1x32xf32, #tpu.memory_space<vmem>>, vector<1x1x32xf32>
      %40 = vector.shape_cast %39 : vector<1x1x32xf32> to vector<1x32xf32>
      %41 = vector.shape_cast %38 : vector<1x32xf32> to vector<1x1x32xf32>
      tpu.vector_store %arg8[%c0_28, %c0_29, %c0_30], %41 {strides = array<i32>} : memref<1x1x32xf32, #tpu.memory_space<vmem>>, vector<1x1x32xf32>,
    } else {
    }
    return
  }
  func.func @transform_0(%arg0: i32, %arg1: i32, %arg2: i32) -> (i32, i32, i32, i32) {
    %c0_i32 = arith.constant 0 : i32
    %c0_i32_0 = arith.constant 0 : i32
    %c0_i32_1 = arith.constant 0 : i32
    return %arg0, %arg2, %c0_i32, %c0_i32_0 : i32, i32, i32, i32
  }
  func.func @transform_1(%arg0: i32, %arg1: i32, %arg2: i32) -> (i32, i32) {
    %c0_i32 = arith.constant 0 : i32
    %c0_i32_0 = arith.constant 0 : i32
    %c0_i32_1 = arith.constant 0 : i32
    return %c0_i32, %c0_i32_0 : i32, i32
  }
  func.func @transform_2(%arg0: i32, %arg1: i32, %arg2: i32) -> (i32, i32) {
    %c0_i32 = arith.constant 0 : i32
    %c0_i32_0 = arith.constant 0 : i32
    %c0_i32_1 = arith.constant 0 : i32
    return %c0_i32, %c0_i32_0 : i32, i32
  }
  func.func @transform_3(%arg0: i32, %arg1: i32, %arg2: i32) -> (i32, i32) {
    %c0_i32 = arith.constant 0 : i32
    %c0_i32_0 = arith.constant 0 : i32
    %c0_i32_1 = arith.constant 0 : i32
    return %c0_i32, %c0_i32_0 : i32, i32
  }
  func.func @transform_4(%arg0: i32, %arg1: i32, %arg2: i32) -> (i32, i32, i32) {
    %c0_i32 = arith.constant 0 : i32
    %c0_i32_0 = arith.constant 0 : i32
    %c0_i32_1 = arith.constant 0 : i32
    return %arg0, %c0_i32, %c0_i32_0 : i32, i32, i32
  }
  func.func @transform_5(%arg0: i32, %arg1: i32, %arg2: i32) -> (i32, i32, i32) {
    %c0_i32 = arith.constant 0 : i32
    %c0_i32_0 = arith.constant 0 : i32
    %c0_i32_1 = arith.constant 0 : i32
    return %arg0, %c0_i32, %c0_i32_0 : i32, i32, i32
  }
}

</mosaic_0001>

<llo_original>
// kernel: tpu_custom_call.1
$region0: #{tpu_custom_call.1}
  #allocation0 [shape = 'u32[]', space=smem, size = 0x4, offset = 0x4, fixed_abs, tag = 'smem constant byte address 0x4 - core index']
  #allocation1 [shape = 'u32[72,128]{1,0:T(1,128)}', space=vmem, size = 0x9000, scoped, tag = 'internal scratch']
  #allocation2 [shape = 'f32[1,32]{1,0:T(1,128)}', space=vmem, size = 0x200, scoped, tag = 'scratch operand']
  #allocation3 [shape = 'f32[1,32]{1,0:T(1,128)}', space=vmem, size = 0x200, scoped, tag = 'scratch operand']
  %s0 = inlined_call_operand.hbm [shape: f32[2,16,16,32], index: 0, kind: input, shape index: {}]
  %s1 = inlined_call_operand.hbm [shape: f32[1,32], index: 1, kind: input, shape index: {}]
  %s2 = inlined_call_operand.vmem [shape: f32[1,32], index: 2, kind: input, shape index: {}]
  %s3 = inlined_call_operand.hbm [shape: f32[32,32], index: 3, kind: input, shape index: {}]
  %s4 = inlined_call_operand.hbm [shape: f32[2,1,32], index: 4, kind: output, shape index: {0}]
  %s5 = inlined_call_operand.hbm [shape: f32[2,1,32], index: 5, kind: output, shape index: {1}]
  %6 = xla_tuple %s4, %s5
  %s7 = sld [smem:[#allocation0]]
  $region89: #{tpu_custom_call.1} parent=0
    _
  %s9 = ssub.s32 1, %s7
  %s10 = scalar_select 0, %s9, %s7
  $region1: #{tpu_custom_call.1} parent=0
    #allocation4 [shape = 'u8[131072]{0}', space=vmem, size = 0x20000, scoped, tag = 'input window, operand 0']
    #allocation5 [shape = 's32[2]{0}', space=sflag, size = 0x8, scoped, tag = 'scoped memory for tpu_custom_call.1']
    #allocation6 [shape = 's32[2]{0}', space=sflag, size = 0x8, scoped, tag = 'scoped memory for tpu_custom_call.1']
    #allocation7 [shape = 'u8[512]{0}', space=vmem, size = 0x400, scoped, tag = 'input window, operand 1, single buffered']
    #allocation8 [shape = 's32[1]{0}', space=sflag, size = 0x4, scoped, tag = 'scoped memory for tpu_custom_call.1']
    #allocation9 [shape = 'u8[16384]{0}', space=vmem, size = 0x4000, scoped, tag = 'input window, operand 3, single buffered']
    #allocation10 [shape = 'u8[1024]{0}', space=vmem, size = 0x400, scoped, tag = 'output window, operand 0']
    #allocation11 [shape = 'u8[1024]{0}', space=vmem, size = 0x400, scoped, tag = 'output window, operand 1']
    #allocation12 [shape = 's32[2]{0}', space=sflag, size = 0x8, scoped, tag = 'scoped memory for tpu_custom_call.1']
    %11 = vsyncpa [#allocation5], 0
    %s12 = scalar_lea.sflag [#allocation5], 1
    %13 = vsyncpa %s12, 0
    %14 = vsyncpa [#allocation8], 0
    %15 = vsyncpa [#allocation6], 0
    %s16 = scalar_lea.sflag [#allocation6], 1
    %17 = vsyncpa %s16, 0
    %18 = vsyncpa [#allocation12], 0
    %s19 = scalar_lea.sflag [#allocation12], 1
    %20 = vsyncpa %s19, 0
    loop: start=0, step=1, limit=10
    $region2: #{tpu_custom_call.1} parent=1 // loop_pre_header
      _
    $region3: #{tpu_custom_call.1} parent=1 // loop_header
      %s22 = sphi 0, %s26
      %p23 = scmp.ge.s32.totalorder %s22, 10
      %s29 = sphi 0, %s48
      %s30 = sphi 0, %s44
      %s31 = sphi 0, %s40
      %s32 = sphi 0, %s29
      %s33 = sphi 0, %s30
      %s34 = sphi 0, %s31
      %s35 = sphi 0, %s32
      %s36 = sphi 0, %s33
      %s37 = sphi 0, %s34
      %s53 = sphi 0, %s55
      %s56 = sphi 0, %s53
      %s57 = sphi 0, %s56
      %s73 = sphi 0, %s57
      %s77 = sphi 0, %s77
      %s79 = sphi 0, %s77
      %s80 = sphi 0, %s79
      %s94 = sphi 0, %s80
      %s98 = sphi 0, %s98
      %s100 = sphi 0, %s98
      %s101 = sphi 0, %s100
      %s115 = sphi 0, %s101
      %s119 = sphi 0, %s119
      %s121 = sphi 0, %s119
      %s122 = sphi 0, %s121
      %s136 = sphi 0, %s122
      %s142 = sphi 0, %s144
      %s145 = sphi 0, %s142
      %s146 = sphi 0, %s145
      %s162 = sphi 0, %s146
      %s168 = sphi 0, %s170
      %s171 = sphi 0, %s168
      %s172 = sphi 0, %s171
      %s188 = sphi 0, %s172
    $region4: #{tpu_custom_call.1} parent=1 // loop_header_branch
      %25 = sbr.rel (%p23) target = $region8
    $region5: #{tpu_custom_call.1} parent=1 // loop_body
      %s27 = ssub.s32 %s22, 1
      %s28 = ssub.s32 %s22, 2
      %s38 = sadd.s32 1, %s31
      %p39 = scmp.ge.s32.totalorder %s38, 2
      %s40 = scalar_select %p39, 0, %s38
      %s41 = sadd.s32 1, %s30
      %s42 = scalar_select %p39, %s41, %s30
      %p43 = scmp.ge.s32.totalorder %s42, 2
      %s44 = scalar_select %p43, 0, %s42
      %s45 = sadd.s32 1, %s29
      %s46 = scalar_select %p43, %s45, %s29
      %p47 = scmp.ge.s32.totalorder %s46, 2
      %s48 = scalar_select %p47, 0, %s46
      %s49 = ssub.s32 %s29, %s48
      %s50 = ssub.s32 %s31, %s40
      %s51 = sor.u32 %s49, %s50
      %p52 = scmp.eq.s32.totalorder %s51, 0
      %s54 = sadd.s32 %s53, 1
      %s55 = scalar_select %p52, %s53, %s54
      %p58 = pneg %p52
      %p59 = scmp.eq.s32.totalorder %s22, 7
      %p60 = por %p58, %p59
      %p61 = scmp.ne.s32.totalorder %s53, %s56
      %p62 = scmp.eq.s32.totalorder %s22, 0
      %p63 = por %p61, %p62
      %p64 = scmp.ne.s32.totalorder %s53, %s56
      %p65 = scmp.eq.s32.totalorder %s27, 7
      %p66 = por %p64, %p65
      %p67 = scmp.ne.s32.totalorder %s56, %s57
      %p68 = scmp.eq.s32.totalorder %s27, 0
      %p69 = por %p67, %p68
      %p70 = scmp.ne.s32.totalorder %s56, %s57
      %p71 = scmp.eq.s32.totalorder %s28, 7
      %p72 = por %p70, %p71
      %p74 = scmp.ne.s32.totalorder %s57, %s73
      %p75 = scmp.eq.s32.totalorder %s28, 0
      %p76 = por %p74, %p75
      %s78 = sadd.s32 %s77, 1
      %p81 = scmp.eq.s32.totalorder %s22, 7
      %p82 = scmp.ne.s32.totalorder %s77, %s79
      %p83 = scmp.eq.s32.totalorder %s22, 0
      %p84 = por %p82, %p83
      %p85 = scmp.ne.s32.totalorder %s77, %s79
      %p86 = scmp.eq.s32.totalorder %s27, 7
      %p87 = por %p85, %p86
      %p88 = scmp.ne.s32.totalorder %s79, %s80
      %p89 = scmp.eq.s32.totalorder %s27, 0
      %p90 = por %p88, %p89
      %p91 = scmp.ne.s32.totalorder %s79, %s80
      %p92 = scmp.eq.s32.totalorder %s28, 7
      %p93 = por %p91, %p92
      %p95 = scmp.ne.s32.totalorder %s80, %s94
      %p96 = scmp.eq.s32.totalorder %s28, 0
      %p97 = por %p95, %p96
      %s99 = sadd.s32 %s98, 1
      %p102 = scmp.eq.s32.totalorder %s22, 7
      %p103 = scmp.ne.s32.totalorder %s98, %s100
      %p104 = scmp.eq.s32.totalorder %s22, 0
      %p105 = por %p103, %p104
      %p106 = scmp.ne.s32.totalorder %s98, %s100
      %p107 = scmp.eq.s32.totalorder %s27, 7
      %p108 = por %p106, %p107
      %p109 = scmp.ne.s32.totalorder %s100, %s101
      %p110 = scmp.eq.s32.totalorder %s27, 0
      %p111 = por %p109, %p110
      %p112 = scmp.ne.s32.totalorder %s100, %s101
      %p113 = scmp.eq.s32.totalorder %s28, 7
      %p114 = por %p112, %p113
      %p116 = scmp.ne.s32.totalorder %s101, %s115
      %p117 = scmp.eq.s32.totalorder %s28, 0
      %p118 = por %p116, %p117
      %s120 = sadd.s32 %s119, 1
      %p123 = scmp.eq.s32.totalorder %s22, 7
      %p124 = scmp.ne.s32.totalorder %s119, %s121
      %p125 = scmp.eq.s32.totalorder %s22, 0
      %p126 = por %p124, %p125
      %p127 = scmp.ne.s32.totalorder %s119, %s121
      %p128 = scmp.eq.s32.totalorder %s27, 7
      %p129 = por %p127, %p128
      %p130 = scmp.ne.s32.totalorder %s121, %s122
      %p131 = scmp.eq.s32.totalorder %s27, 0
      %p132 = por %p130, %p131
      %p133 = scmp.ne.s32.totalorder %s121, %s122
      %p134 = scmp.eq.s32.totalorder %s28, 7
      %p135 = por %p133, %p134
      %p137 = scmp.ne.s32.totalorder %s122, %s136
      %p138 = scmp.eq.s32.totalorder %s28, 0
      %p139 = por %p137, %p138
      %s140 = ssub.s32 %s29, %s48
      %p141 = scmp.eq.s32.totalorder %s140, 0
      %s143 = sadd.s32 %s142, 1
      %s144 = scalar_select %p141, %s142, %s143
      %p147 = pneg %p141
      %p148 = scmp.eq.s32.totalorder %s22, 7
      %p149 = por %p147, %p148
      %p150 = scmp.ne.s32.totalorder %s142, %s145
      %p151 = scmp.eq.s32.totalorder %s22, 0
      %p152 = por %p150, %p151
      %p153 = scmp.ne.s32.totalorder %s142, %s145
      %p154 = scmp.eq.s32.totalorder %s27, 7
      %p155 = por %p153, %p154
      %p156 = scmp.ne.s32.totalorder %s145, %s146
      %p157 = scmp.eq.s32.totalorder %s27, 0
      %p158 = por %p156, %p157
      %p159 = scmp.ne.s32.totalorder %s145, %s146
      %p160 = scmp.eq.s32.totalorder %s28, 7
      %p161 = por %p159, %p160
      %p163 = scmp.ne.s32.totalorder %s146, %s162
      %p164 = scmp.eq.s32.totalorder %s28, 0
      %p165 = por %p163, %p164
      %s166 = ssub.s32 %s29, %s48
      %p167 = scmp.eq.s32.totalorder %s166, 0
      %s169 = sadd.s32 %s168, 1
      %s170 = scalar_select %p167, %s168, %s169
      %p173 = pneg %p167
      %p174 = scmp.eq.s32.totalorder %s22, 7
      %p175 = por %p173, %p174
      %p176 = scmp.ne.s32.totalorder %s168, %s171
      %p177 = scmp.eq.s32.totalorder %s22, 0
      %p178 = por %p176, %p177
      %p179 = scmp.ne.s32.totalorder %s168, %s171
      %p180 = scmp.eq.s32.totalorder %s27, 7
      %p181 = por %p179, %p180
      %p182 = scmp.ne.s32.totalorder %s171, %s172
      %p183 = scmp.eq.s32.totalorder %s27, 0
      %p184 = por %p182, %p183
      %p185 = scmp.ne.s32.totalorder %s171, %s172
      %p186 = scmp.eq.s32.totalorder %s28, 7
      %p187 = por %p185, %p186
      %p189 = scmp.ne.s32.totalorder %s172, %s188
      %p190 = scmp.eq.s32.totalorder %s28, 0
      %p191 = por %p189, %p190
      %p192 = scmp.le.s32.totalorder 1, %s22
      %p193 = scmp.lt.s32.totalorder %s22, 9
      %p194 = pnand %p192, %p193
      %p195 = pneg %p194
      // Predicated region
      $region9: #{tpu_custom_call.1} parent=5 // pred_check
        _
      $region10: #{tpu_custom_call.1} parent=5 // pred_check_branch
        %197 = sbr.rel (%p194) target = $region12
      $region11: #{tpu_custom_call.1} parent=5 // pred_region
        %s198 = ssub.s32 %s22, 1
        // Predicated region
        $region13: #{tpu_custom_call.1} parent=11 // pred_check
          %p199 = pneg %p90
        $region14: #{tpu_custom_call.1} parent=11 // pred_check_branch
          %201 = sbr.rel (%p199) target = $region16
        $region15: #{tpu_custom_call.1} parent=11 // pred_region
          %203 = vsyncadd [#allocation8], 0
          %s205 = sshll.u32 %s1, 4
          %s206 = int_to_ptr.hbm [resolvable:$true] %s205
          %s207 = sshll.u32 [#allocation7], 4
          %s208 = int_to_ptr.vmem [resolvable:$true] %s207
          %210 = dma.hbm_to_vmem [thread:$0]  %s206, 16, %s208, [#allocation8]
        $region16: #{tpu_custom_call.1} parent=11 // pred_fallthru
          _
        // Predicated region
        $region17: #{tpu_custom_call.1} parent=11 // pred_check
          %p211 = pneg %p111
        $region18: #{tpu_custom_call.1} parent=11 // pred_check_branch
          %213 = sbr.rel (%p211) target = $region20
        $region19: #{tpu_custom_call.1} parent=11 // pred_region
          _
        $region20: #{tpu_custom_call.1} parent=11 // pred_fallthru
          _
        // Predicated region
        $region21: #{tpu_custom_call.1} parent=11 // pred_check
          %p214 = pneg %p132
        $region22: #{tpu_custom_call.1} parent=11 // pred_check_branch
          %216 = sbr.rel (%p214) target = $region24
        $region23: #{tpu_custom_call.1} parent=11 // pred_region
          %218 = vsyncadd [#allocation8], 0
          %s219 = sshll.u32 %s3, 4
          %s220 = int_to_ptr.hbm [resolvable:$true] %s219
          %s221 = sshll.u32 [#allocation9], 4
          %s222 = int_to_ptr.vmem [resolvable:$true] %s221
          %227 = dma.hbm_to_vmem [thread:$0]  %s220, 512, %s222, [#allocation8], 128, 128, 8
        $region24: #{tpu_custom_call.1} parent=11 // pred_fallthru
          _
      $region12: #{tpu_custom_call.1} parent=5 // pred_fallthru
        _
      %p228 = scmp.lt.s32.totalorder %s22, 8
      // Predicated region
      $region25: #{tpu_custom_call.1} parent=5 // pred_check
        %p229 = pneg %p228
      $region26: #{tpu_custom_call.1} parent=5 // pred_check_branch
        %231 = sbr.rel (%p229) target = $region28
      $region27: #{tpu_custom_call.1} parent=5 // pred_region
        // Predicated region
        $region29: #{tpu_custom_call.1} parent=27 // pred_check
          %p232 = pneg %p63
        $region30: #{tpu_custom_call.1} parent=27 // pred_check_branch
          %234 = sbr.rel (%p232) target = $region32
        $region31: #{tpu_custom_call.1} parent=27 // pred_region
          %s235 = sand.u32 %s53, 1
          %s236 = scalar_lea.sflag [#allocation5], %s235
          %s237 = sand.u32 %s53, 1
          %s238 = smul.addr %s237, 128
          %s239 = scalar_lea.vmem [#allocation4], %s238
          %s240 = smul.u32 8, %s31
          %242 = vsyncadd %s236, 0
          %s243 = smul.addr %s240, 2
          %s244 = smul.addr %s29, 32
          %s245 = sadd.s32 %s243, %s244
          %s246 = smul.addr %s245, 8
          %s247 = scalar_lea.hbm %s0, %s246
          %s248 = sshll.u32 %s247, 4
          %s249 = int_to_ptr.hbm [resolvable:$true] %s248
          %s250 = sshll.u32 %s239, 4
          %s251 = int_to_ptr.vmem [resolvable:$true] %s250
          %256 = dma.hbm_to_vmem [thread:$0]  %s249, 2048, %s251, %s236, 128, 128, 8
        $region32: #{tpu_custom_call.1} parent=27 // pred_fallthru
          _
      $region28: #{tpu_custom_call.1} parent=5 // pred_fallthru
        _
      %p257 = scmp.le.s32.totalorder 1, %s22
      %p258 = scmp.lt.s32.totalorder %s22, 9
      %p259 = pnand %p257, %p258
      %p260 = pneg %p259
      // Predicated region
      $region33: #{tpu_custom_call.1} parent=5 // pred_check
        _
      $region34: #{tpu_custom_call.1} parent=5 // pred_check_branch
        %262 = sbr.rel (%p259) target = $region36
      $region35: #{tpu_custom_call.1} parent=5 // pred_region
        %s263 = ssub.s32 %s22, 1
        %s264 = sand.u32 %s56, 1
        %s265 = scalar_lea.sflag [#allocation5], %s264
        %s266 = sand.u32 %s56, 1
        %s267 = smul.addr %s266, 128
        %s268 = scalar_lea.vmem [#allocation4], %s267
        // Predicated region
        $region37: #{tpu_custom_call.1} parent=35 // pred_check
          %p269 = pneg %p69
        $region38: #{tpu_custom_call.1} parent=35 // pred_check_branch
          %271 = sbr.rel (%p269) target = $region40
        $region39: #{tpu_custom_call.1} parent=35 // pred_region
          %273 = dma.done %s265, 2048
        $region40: #{tpu_custom_call.1} parent=35 // pred_fallthru
          _
        // Predicated region
        $region41: #{tpu_custom_call.1} parent=35 // pred_check
          %p274 = pneg %p90
        $region42: #{tpu_custom_call.1} parent=35 // pred_check_branch
          %276 = sbr.rel (%p274) target = $region44
        $region43: #{tpu_custom_call.1} parent=35 // pred_region
          %278 = dma.done [#allocation8], 16
        $region44: #{tpu_custom_call.1} parent=35 // pred_fallthru
          _
        // Predicated region
        $region45: #{tpu_custom_call.1} parent=35 // pred_check
          %p279 = pneg %p132
        $region46: #{tpu_custom_call.1} parent=35 // pred_check_branch
          %281 = sbr.rel (%p279) target = $region48
        $region47: #{tpu_custom_call.1} parent=35 // pred_region
          %283 = dma.done [#allocation8], 512
        $region48: #{tpu_custom_call.1} parent=35 // pred_fallthru
          _
        %s284 = sand.u32 %s56, 1
        %s285 = scalar_lea.sflag [#allocation5], %s284
        %s286 = sand.u32 %s56, 1
        %s287 = smul.addr %s286, 128
        %s288 = scalar_lea.vmem [#allocation4], %s287
        %p289 = pneg %p69
        %p290 = pneg %p66
        %p291 = pneg %p90
        %p292 = pneg %p87
        %p293 = pneg %p111
        %p294 = pneg %p108
        %p295 = pneg %p132
        %p296 = pneg %p129
        %p297 = pneg %p158
        %p298 = pneg %p155
        %s299 = sand.u32 %s145, 1
        %s300 = scalar_lea.sflag [#allocation6], %s299
        %s301 = sand.u32 %s145, 1
        %s302 = scalar_lea.vmem [#allocation10], %s301
        %p303 = pneg %p184
        %p304 = pneg %p181
        %s305 = sand.u32 %s171, 1
        %s306 = scalar_lea.sflag [#allocation12], %s305
        %s307 = sand.u32 %s171, 1
        %s308 = scalar_lea.vmem [#allocation11], %s307
        %s309 = smul.u32 8, %s34
        %v310 = vld [vmem:[%s268] sm:$0xff]
        %v311 = vld [vmem:[%s268 + $0x8] sm:$0xff]
        %v312 = vld [vmem:[%s268 + $0x10] sm:$0xff]
        %v313 = vld [vmem:[%s268 + $0x18] sm:$0xff]
        %v314 = vld [vmem:[%s268 + $0x20] sm:$0xff]
        %v315 = vld [vmem:[%s268 + $0x28] sm:$0xff]
        %v316 = vld [vmem:[%s268 + $0x30] sm:$0xff]
        %v317 = vld [vmem:[%s268 + $0x38] sm:$0xff]
        %v318 = vld [vmem:[%s268 + $0x40] sm:$0xff]
        %v319 = vld [vmem:[%s268 + $0x48] sm:$0xff]
        %v320 = vld [vmem:[%s268 + $0x50] sm:$0xff]
        %v321 = vld [vmem:[%s268 + $0x58] sm:$0xff]
        %v322 = vld [vmem:[%s268 + $0x60] sm:$0xff]
        %v323 = vld [vmem:[%s268 + $0x68] sm:$0xff]
        %v324 = vld [vmem:[%s268 + $0x70] sm:$0xff]
        %v325 = vld [vmem:[%s268 + $0x78] sm:$0xff]
        %p326 = scmp.eq.s32.totalorder %s34, 0
        // Predicated region
        $region49: #{tpu_custom_call.1} parent=35 // pred_check
          %p327 = pneg %p326
        $region50: #{tpu_custom_call.1} parent=35 // pred_check_branch
          %329 = sbr.rel (%p327) target = $region52
        $region51: #{tpu_custom_call.1} parent=35 // pred_region
          %vm330 = vcmask 253952
          %331 = vst.msk [vmem:[#allocation2] sm:$0x1] %vm330, 0.0
        $region52: #{tpu_custom_call.1} parent=35 // pred_fallthru
          _
        %p332 = scmp.eq.s32.totalorder %s33, 0
        // Predicated region
        $region53: #{tpu_custom_call.1} parent=35 // pred_check
          %p333 = pneg %p332
        $region54: #{tpu_custom_call.1} parent=35 // pred_check_branch
          %335 = sbr.rel (%p333) target = $region56
        $region55: #{tpu_custom_call.1} parent=35 // pred_region
          %v336 = vld [vmem:[#allocation2] sm:$0x1]
          %vm337 = vcmask 261120
          %v338 = vsel %vm337, %v310, 0.0
          %v339 = vsel %vm337, %v311, 0.0
          %v340 = vadd.f32 %v338, %v339
          %v341 = vsel %vm337, %v312, 0.0
          %v342 = vadd.f32 %v340, %v341
          %v343 = vsel %vm337, %v313, 0.0
          %v344 = vadd.f32 %v342, %v343
          %v345 = vsel %vm337, %v314, 0.0
          %v346 = vadd.f32 %v344, %v345
          %v347 = vsel %vm337, %v315, 0.0
          %v348 = vadd.f32 %v346, %v347
          %v349 = vsel %vm337, %v316, 0.0
          %v350 = vadd.f32 %v348, %v349
          %v351 = vsel %vm337, %v317, 0.0
          %v352 = vadd.f32 %v350, %v351
          %v353 = vsel %vm337, %v318, 0.0
          %v354 = vadd.f32 %v352, %v353
          %v355 = vsel %vm337, %v319, 0.0
          %v356 = vadd.f32 %v354, %v355
          %v357 = vsel %vm337, %v320, 0.0
          %v358 = vadd.f32 %v356, %v357
          %v359 = vsel %vm337, %v321, 0.0
          %v360 = vadd.f32 %v358, %v359
          %v361 = vsel %vm337, %v322, 0.0
          %v362 = vadd.f32 %v360, %v361
          %v363 = vsel %vm337, %v323, 0.0
          %v364 = vadd.f32 %v362, %v363
          %v365 = vsel %vm337, %v324, 0.0
          %v366 = vadd.f32 %v364, %v365
          %v367 = vsel %vm337, %v325, 0.0
          %v368 = vadd.f32 %v366, %v367
          %v369 = vrot.slane %v368, 4
          %v370 = vadd.f32 %v368, %v369
          %v371 = vrot.slane %v370, 2
          %v372 = vadd.f32 %v370, %v371
          %v373 = vrot.slane %v372, 1
          %v374 = vadd.f32 %v372, %v373
          %v375 = vadd.f32 %v336, %v374
          %vm376 = vcmask 253952
          %377 = vst.msk [vmem:[#allocation2] sm:$0x1] %vm376, %v375
        $region56: #{tpu_custom_call.1} parent=35 // pred_fallthru
          _
        %p378 = scmp.eq.s32.totalorder %s33, 1
        // Predicated region
        $region57: #{tpu_custom_call.1} parent=35 // pred_check
          %p379 = pneg %p378
        $region58: #{tpu_custom_call.1} parent=35 // pred_check_branch
          %381 = sbr.rel (%p379) target = $region60
        $region59: #{tpu_custom_call.1} parent=35 // pred_region
          %v382 = vld [vmem:[#allocation3] sm:$0x1]
          %v384 = vperm.slane %v382, 0
          %v386 = vsub.f32 %v310, %v384
          %v387 = vsub.f32 %v311, %v384
          %v388 = vsub.f32 %v312, %v384
          %v389 = vsub.f32 %v313, %v384
          %v390 = vsub.f32 %v314, %v384
          %v391 = vsub.f32 %v315, %v384
          %v392 = vsub.f32 %v316, %v384
          %v393 = vsub.f32 %v317, %v384
          %v394 = vsub.f32 %v318, %v384
          %v395 = vsub.f32 %v319, %v384
          %v396 = vsub.f32 %v320, %v384
          %v397 = vsub.f32 %v321, %v384
          %v398 = vsub.f32 %v322, %v384
          %v399 = vsub.f32 %v323, %v384
          %v400 = vsub.f32 %v324, %v384
          %v401 = vsub.f32 %v325, %v384
          %v402 = vld [vmem:[#allocation2] sm:$0x1]
          %v403 = vmul.f32 %v386, %v386
          %v404 = vmul.f32 %v387, %v387
          %v405 = vmul.f32 %v388, %v388
          %v406 = vmul.f32 %v389, %v389
          %v407 = vmul.f32 %v390, %v390
          %v408 = vmul.f32 %v391, %v391
          %v409 = vmul.f32 %v392, %v392
          %v410 = vmul.f32 %v393, %v393
          %v411 = vmul.f32 %v394, %v394
          %v412 = vmul.f32 %v395, %v395
          %v413 = vmul.f32 %v396, %v396
          %v414 = vmul.f32 %v397, %v397
          %v415 = vmul.f32 %v398, %v398
          %v416 = vmul.f32 %v399, %v399
          %v417 = vmul.f32 %v400, %v400
          %v418 = vmul.f32 %v401, %v401
          %vm419 = vcmask 261120
          %v420 = vsel %vm419, %v403, 0.0
          %v421 = vsel %vm419, %v404, 0.0
          %v422 = vadd.f32 %v420, %v421
          %v423 = vsel %vm419, %v405, 0.0
          %v424 = vadd.f32 %v422, %v423
          %v425 = vsel %vm419, %v406, 0.0
          %v426 = vadd.f32 %v424, %v425
          %v427 = vsel %vm419, %v407, 0.0
          %v428 = vadd.f32 %v426, %v427
          %v429 = vsel %vm419, %v408, 0.0
          %v430 = vadd.f32 %v428, %v429
          %v431 = vsel %vm419, %v409, 0.0
          %v432 = vadd.f32 %v430, %v431
          %v433 = vsel %vm419, %v410, 0.0
          %v434 = vadd.f32 %v432, %v433
          %v435 = vsel %vm419, %v411, 0.0
          %v436 = vadd.f32 %v434, %v435
          %v437 = vsel %vm419, %v412, 0.0
          %v438 = vadd.f32 %v436, %v437
          %v439 = vsel %vm419, %v413, 0.0
          %v440 = vadd.f32 %v438, %v439
          %v441 = vsel %vm419, %v414, 0.0
          %v442 = vadd.f32 %v440, %v441
          %v443 = vsel %vm419, %v415, 0.0
          %v444 = vadd.f32 %v442, %v443
          %v445 = vsel %vm419, %v416, 0.0
          %v446 = vadd.f32 %v444, %v445
          %v447 = vsel %vm419, %v417, 0.0
          %v448 = vadd.f32 %v446, %v447
          %v449 = vsel %vm419, %v418, 0.0
          %v450 = vadd.f32 %v448, %v449
          %v451 = vrot.slane %v450, 4
          %v452 = vadd.f32 %v450, %v451
          %v453 = vrot.slane %v452, 2
          %v454 = vadd.f32 %v452, %v453
          %v455 = vrot.slane %v454, 1
          %v456 = vadd.f32 %v454, %v455
          %v457 = vadd.f32 %v402, %v456
          %vm458 = vcmask 253952
          %459 = vst.msk [vmem:[#allocation2] sm:$0x1] %vm458, %v457
        $region60: #{tpu_custom_call.1} parent=35 // pred_fallthru
          _
        %p460 = scmp.eq.s32.totalorder %s34, 1
        %p461 = pnand %p332, %p460
        %p462 = pneg %p461
        // Predicated region
        $region61: #{tpu_custom_call.1} parent=35 // pred_check
          _
        $region62: #{tpu_custom_call.1} parent=35 // pred_check_branch
          %464 = sbr.rel (%p461) target = $region64
        $region63: #{tpu_custom_call.1} parent=35 // pred_region
          %v465 = vld [vmem:[#allocation2] sm:$0x1]
          %v466 = vld [vmem:[#allocation9] sm:$0xff]
          %v467 = vld [vmem:[#allocation9 + $0x8] sm:$0xff]
          %v468 = vld [vmem:[#allocation9 + $0x10] sm:$0xff]
          %v469 = vld [vmem:[#allocation9 + $0x18] sm:$0xff]
          %vm470 = vcmask 261120
          %v472 = vsel %vm470, %v465, 0
          %474 = vmatpush.msra.mxu0 0.0
          %475 = vmatpush.msra.mxu0 0.0
          %476 = vmatpush.msra.mxu0 0.0
          %477 = vmatpush.msra.mxu0 0.0
          %478 = vmatpush.msra.mxu0 0.0
          %479 = vmatpush.msra.mxu0 0.0
          %480 = vmatpush.msra.mxu0 0.0
          %481 = vmatpush.msra.mxu0 0.0
          %482 = vmatpush.msra.mxu0 0.0
          %483 = vmatpush.msra.mxu0 0.0
          %484 = vmatpush.msra.mxu0 0.0
          %485 = vmatpush.msra.mxu0 0.0
          %486 = vmatpush.msra.mxu0 %v469
          %487 = vmatpush.msra.mxu0 %v468
          %488 = vmatpush.msra.mxu0 %v467
          %489 = vmatpush.msra.mxu0 %v466
          %490 = vmatmul.f32.gmra.mxu0 %v472
          %v491 = vpop.f32.mrf.mxu0
          %v492 = vadd.f32 0.0, %v491
          %493 = vdwg.mxu0
          %v494 = vmul.f32 %v492, 0.00390625
          %vm495 = vcmask 253952
          %496 = vst.msk [vmem:[#allocation3] sm:$0x1] %vm495, %v494
        $region64: #{tpu_custom_call.1} parent=35 // pred_fallthru
          _
        %p497 = pnand %p378, %p460
        %p498 = pneg %p497
        // Predicated region
        $region65: #{tpu_custom_call.1} parent=35 // pred_check
          _
        $region66: #{tpu_custom_call.1} parent=35 // pred_check_branch
          %500 = sbr.rel (%p497) target = $region68
        $region67: #{tpu_custom_call.1} parent=35 // pred_region
          %v501 = vld [vmem:[#allocation2] sm:$0x1]
          %v502 = vld [vmem:[#allocation9] sm:$0xff]
          %v503 = vld [vmem:[#allocation9 + $0x8] sm:$0xff]
          %v504 = vld [vmem:[#allocation9 + $0x10] sm:$0xff]
          %v505 = vld [vmem:[#allocation9 + $0x18] sm:$0xff]
          %vm506 = vcmask 261120
          %v508 = vsel %vm506, %v501, 0
          %510 = vmatpush.msra.mxu0 0.0
          %511 = vmatpush.msra.mxu0 0.0
          %512 = vmatpush.msra.mxu0 0.0
          %513 = vmatpush.msra.mxu0 0.0
          %514 = vmatpush.msra.mxu0 0.0
          %515 = vmatpush.msra.mxu0 0.0
          %516 = vmatpush.msra.mxu0 0.0
          %517 = vmatpush.msra.mxu0 0.0
          %518 = vmatpush.msra.mxu0 0.0
          %519 = vmatpush.msra.mxu0 0.0
          %520 = vmatpush.msra.mxu0 0.0
          %521 = vmatpush.msra.mxu0 0.0
          %522 = vmatpush.msra.mxu0 %v505
          %523 = vmatpush.msra.mxu0 %v504
          %524 = vmatpush.msra.mxu0 %v503
          %525 = vmatpush.msra.mxu0 %v502
          %526 = vmatmul.f32.gmra.mxu0 %v508
          %v527 = vpop.f32.mrf.mxu0
          %v528 = vadd.f32 0.0, %v527
          %529 = vdwg.mxu0
          %v530 = vmul.f32 %v528, 0.00390625
          %v531 = vadd.f32 %v530, 1e-06
          %v532 = vrsqrt.pop %v531
          %v533 = vmul.f32 %v532, %v531
          %v534 = vmul.f32 %v533, %v532
          %v535 = vmul.f32 0.5, %v534
          %v536 = vsub.f32 1.5, %v535
          %v537 = vmul.f32 %v532, %v536
          %vm538 = vweird.f32 %v531
          %vm539 = vweird.f32 %v532
          %vm540 = vmor %vm538, %vm539
          %v541 = vsel %vm540, %v532, %v537
          %v542 = vld [vmem:[#allocation7] sm:$0x1]
          %v543 = vmul.f32 %v542, %v541
          %vm544 = vcmask 253952
          %545 = vst.msk [vmem:[%s302] sm:$0x1] %vm544, %v543
          %v546 = vld [vmem:[%s2] sm:$0x1]
          %v547 = vld [vmem:[#allocation3] sm:$0x1]
          %v548 = vmul.f32 %v543, %v547
          %v549 = vsub.f32 %v546, %v548
          %550 = vst.msk [vmem:[%s308] sm:$0x1] %vm544, %v549
        $region68: #{tpu_custom_call.1} parent=35 // pred_fallthru
          _
        %s551 = sand.u32 %s145, 1
        %s552 = scalar_lea.sflag [#allocation6], %s551
        %s553 = sand.u32 %s145, 1
        %s554 = scalar_lea.vmem [#allocation10], %s553
        %s555 = sand.u32 %s171, 1
        %s556 = scalar_lea.sflag [#allocation12], %s555
        %s557 = sand.u32 %s171, 1
        %s558 = scalar_lea.vmem [#allocation11], %s557
        // Predicated region
        $region69: #{tpu_custom_call.1} parent=35 // pred_check
          %p559 = pneg %p155
        $region70: #{tpu_custom_call.1} parent=35 // pred_check_branch
          %561 = sbr.rel (%p559) target = $region72
        $region71: #{tpu_custom_call.1} parent=35 // pred_region
          %563 = vsyncadd %s552, 0
          %s564 = scalar_lea.hbm %s4, %s32
          %s566 = sshll.u32 %s554, 4
          %s567 = int_to_ptr.vmem [resolvable:$true] %s566
          %s568 = sshll.u32 %s564, 4
          %s569 = int_to_ptr.hbm [resolvable:$true] %s568
          %571 = dma.vmem_to_hbm [thread:$0]  %s567, 16, %s569, %s552
        $region72: #{tpu_custom_call.1} parent=35 // pred_fallthru
          _
        // Predicated region
        $region73: #{tpu_custom_call.1} parent=35 // pred_check
          %p572 = pneg %p181
        $region74: #{tpu_custom_call.1} parent=35 // pred_check_branch
          %574 = sbr.rel (%p572) target = $region76
        $region75: #{tpu_custom_call.1} parent=35 // pred_region
          %576 = vsyncadd %s556, 0
          %s577 = scalar_lea.hbm %s5, %s32
          %s579 = sshll.u32 %s558, 4
          %s580 = int_to_ptr.vmem [resolvable:$true] %s579
          %s581 = sshll.u32 %s577, 4
          %s582 = int_to_ptr.hbm [resolvable:$true] %s581
          %584 = dma.vmem_to_hbm [thread:$0]  %s580, 16, %s582, %s556
        $region76: #{tpu_custom_call.1} parent=35 // pred_fallthru
          _
      $region36: #{tpu_custom_call.1} parent=5 // pred_fallthru
        _
      %p585 = scmp.le.s32.totalorder 2, %s22
      // Predicated region
      $region77: #{tpu_custom_call.1} parent=5 // pred_check
        %p586 = pneg %p585
      $region78: #{tpu_custom_call.1} parent=5 // pred_check_branch
        %588 = sbr.rel (%p586) target = $region80
      $region79: #{tpu_custom_call.1} parent=5 // pred_region
        %s589 = ssub.s32 %s22, 2
        // Predicated region
        $region81: #{tpu_custom_call.1} parent=79 // pred_check
          %p590 = pneg %p161
        $region82: #{tpu_custom_call.1} parent=79 // pred_check_branch
          %592 = sbr.rel (%p590) target = $region84
        $region83: #{tpu_custom_call.1} parent=79 // pred_region
          %s593 = sand.u32 %s146, 1
          %s594 = scalar_lea.sflag [#allocation6], %s593
          %s595 = sand.u32 %s146, 1
          %s596 = scalar_lea.vmem [#allocation10], %s595
          %598 = dma.done %s594, 16
        $region84: #{tpu_custom_call.1} parent=79 // pred_fallthru
          _
        // Predicated region
        $region85: #{tpu_custom_call.1} parent=79 // pred_check
          %p599 = pneg %p187
        $region86: #{tpu_custom_call.1} parent=79 // pred_check_branch
          %601 = sbr.rel (%p599) target = $region88
        $region87: #{tpu_custom_call.1} parent=79 // pred_region
          %s602 = sand.u32 %s172, 1
          %s603 = scalar_lea.sflag [#allocation12], %s602
          %s604 = sand.u32 %s172, 1
          %s605 = scalar_lea.vmem [#allocation11], %s604
          %607 = dma.done %s603, 16
        $region88: #{tpu_custom_call.1} parent=79 // pred_fallthru
          _
      $region80: #{tpu_custom_call.1} parent=5 // pred_fallthru
        _
    $region6: #{tpu_custom_call.1} parent=1 // loop_footer
      %s26 = sadd.s32 1, %s22
    $region7: #{tpu_custom_call.1} parent=1 // loop_footer_branch
      %21 = sbr.rel target = $region3
    $region8: #{tpu_custom_call.1} parent=1 // loop_exit
      _
    %608 = vsyncpa [#allocation5], 1
    %s609 = scalar_lea.sflag [#allocation5], 1
    %610 = vsyncpa %s609, 1
    %611 = vsyncpa [#allocation8], 1
    %612 = vsyncpa [#allocation6], 1
    %s613 = scalar_lea.sflag [#allocation6], 1
    %614 = vsyncpa %s613, 1
    %615 = vsyncpa [#allocation12], 1
    %s616 = scalar_lea.sflag [#allocation12], 1
    %617 = vsyncpa %s616, 1

</llo_original>
